<compile_context>
chip_gen: v5e
topology: v5e:2x2
jax: 0.10.0
libtpu: 0.0.40
codegen_flags: <defaults>
</compile_context>

<pallas_src>
import functools

import jax
import jax.numpy as jnp
from jax.experimental import pallas as pl
from jax.experimental.pallas import tpu as pltpu

LN_EPS = 1e-5  # PyTorch LayerNorm default


def _round_up(x, m):
    return ((x + m - 1) // m) * m


def _tpu_defaults():
    """(generation, default row tile, per-core VMEM cap in bytes)."""
    gen = 6
    try:
        kind = jax.devices()[0].device_kind.lower()
        for g in (7, 6, 5, 4):
            if ("v%d" % g) in kind or ("tpu%d" % g) in kind:
                gen = g
                break
    except Exception:
        pass
    try:
        vmem_phys = int(pltpu.get_tpu_info().vmem_capacity_bytes)
    except Exception:
        vmem_phys = (64 << 20) if gen >= 7 else (128 << 20)
    if gen >= 7:
        tile_rows = 512          # ~310 FLOP/byte roofline, 2 TCs share HBM
    elif gen == 6:
        tile_rows = 1024         # ~650 FLOP/byte roofline
    else:
        tile_rows = 384          # v5e already near compute-bound here
    vmem_cap = min(int(vmem_phys * 3 // 4), 112 << 20)   # 96 MiB v5e/v6e, 48 MiB v7x
    return gen, tile_rows, vmem_cap


def _vmem_bytes(tm, fc, dp, act_bytes):
    return (2 * tm * dp * act_bytes        # x row tile, double-buffered
            + 2 * tm * dp * act_bytes      # out row tile, double-buffered
            + 2 * 2 * dp * fc * 2          # w1 + w2 chunks, double-buffered, bf16
            + tm * dp * (2 + 4)            # xn (bf16) + acc (f32) scratch
            + 2 * (3 * dp + fc) * 4)       # gamma/beta/b1/b2 blocks (tiny)


def _base_sublayer_kernel(x_ref, gamma_ref, beta_ref, w1_ref, b1_ref,
                          w2_ref, b2_ref, o_ref, xn_ref, acc_ref, *, d_real):
    f = pl.program_id(1)

    @pl.when(f == 0)
    def _init():
        x = x_ref[...].astype(jnp.float32)
        tm, dp = x.shape
        inv_d = 1.0 / d_real
        # padded columns of x are zero, so the sum already covers only real cols
        mean = jnp.sum(x, axis=-1, keepdims=True) * inv_d
        if dp == d_real:
            centered = x - mean
        else:
            mask = jax.lax.broadcasted_iota(jnp.int32, (tm, dp), 1) < d_real
            centered = jnp.where(mask, x - mean, 0.0)
        var = jnp.sum(centered * centered, axis=-1, keepdims=True) * inv_d
        xn = centered * jax.lax.rsqrt(var + LN_EPS)
        xn = xn * gamma_ref[...] + beta_ref[...]
        xn_ref[...] = xn.astype(xn_ref.dtype)          # bf16 cache feeding the MXU
        # fold residual + ff2 bias into the accumulator init
        acc_ref[...] = x + b2_ref[...]

    # ff1 chunk + relu: bf16 x bf16 on the MXU, f32 accumulation, f32 bias.
    h = jnp.dot(xn_ref[...], w1_ref[...], preferred_element_type=jnp.float32)
    h = jnp.maximum(h + b1_ref[...], 0.0)

    # ff2 chunk, accumulated into the resident f32 scratch.
    acc_ref[...] += jnp.dot(h.astype(w2_ref.dtype), w2_ref[...],
                            preferred_element_type=jnp.float32)

    @pl.when(f == pl.num_programs(1) - 1)
    def _finalize():
        o_ref[...] = acc_ref[...].astype(o_ref.dtype)


def base_sublayer(xs, gamma, beta, w1, b1, w2, b2, *,
                  tile_rows=None, ffn_chunk=1024):
    """xs: (B, T, D).  Linear weights stored (in_dim, out_dim).  Returns (B, T, D)."""
    B, T, D = xs.shape
    F = w1.shape[1]
    N = B * T

    gen, default_rows, vmem_cap = _tpu_defaults()
    if tile_rows is None:
        tile_rows = default_rows

    act_dt = xs.dtype
    act_bytes = jnp.dtype(act_dt).itemsize

    # --- tiling ----------------------------------------------------------------
    Dp = _round_up(D, 128)                               # lane-dense activations
    f_align = 256 if (F >= 256 and gen >= 6) else 128    # fill the 256x256 MXU
    fc = min(_round_up(ffn_chunk, f_align), _round_up(F, f_align))
    tm = max(8, min(_round_up(tile_rows, 8), _round_up(N, 8)))  # always mult of 8

    # shrink row tile, then FFN chunk, until the estimate fits the VMEM budget
    budget = int(0.85 * vmem_cap)
    while _vmem_bytes(tm, fc, Dp, act_bytes) > budget and tm > 256:
        tm = max(256, _round_up(tm // 2, 8))
    while _vmem_bytes(tm, fc, Dp, act_bytes) > budget and fc > f_align:
        fc = max(f_align, _round_up(fc // 2, f_align))

    # v7x: make sure the "parallel" row axis feeds both TensorCores
    if gen >= 7 and N >= 16 and _round_up(N, tm) == tm:
        tm = max(8, _round_up(-(-N // 2), 8))

    Np = _round_up(N, tm)
    n_row = Np // tm
    Fp = _round_up(F, fc)
    n_f = Fp // fc

    # --- operands (activations stay in the caller's dtype) ----------------------
    f32 = jnp.float32
    x2d = xs.reshape(N, D)
    needs_pad = (Np != N) or (Dp != D)
    if needs_pad:
        x2d = jnp.pad(x2d, ((0, Np - N), (0, Dp - D)))
    gamma_p = jnp.pad(gamma.astype(f32), (0, Dp - D)).reshape(1, Dp)
    beta_p = jnp.pad(beta.astype(f32), (0, Dp - D)).reshape(1, Dp)
    w1_p = jnp.pad(w1, ((0, Dp - D), (0, Fp - F))).astype(jnp.bfloat16)
    b1_p = jnp.pad(b1.astype(f32), (0, Fp - F)).reshape(1, Fp)
    w2_p = jnp.pad(w2, ((0, Fp - F), (0, Dp - D))).astype(jnp.bfloat16)
    b2_p = jnp.pad(b2.astype(f32), (0, Dp - D)).reshape(1, Dp)

    vmem_est = _vmem_bytes(tm, fc, Dp, act_bytes)
    vmem_limit = int(min(max(int(1.3 * vmem_est), 32 << 20), vmem_cap))

    kernel = functools.partial(_base_sublayer_kernel, d_real=D)

    out = pl.pallas_call(
        kernel,
        out_shape=jax.ShapeDtypeStruct((Np, Dp), act_dt),
        grid_spec=pltpu.PrefetchScalarGridSpec(
            num_scalar_prefetch=0,
            grid=(n_row, n_f),
            in_specs=[
                pl.BlockSpec((tm, Dp), lambda i, f: (i, 0)),   # x rows (resident over f)
                pl.BlockSpec((1, Dp), lambda i, f: (0, 0)),    # gamma
                pl.BlockSpec((1, Dp), lambda i, f: (0, 0)),    # beta
                pl.BlockSpec((Dp, fc), lambda i, f: (0, f)),   # w1 chunk
                pl.BlockSpec((1, fc), lambda i, f: (0, f)),    # b1 chunk
                pl.BlockSpec((fc, Dp), lambda i, f: (f, 0)),   # w2 chunk
                pl.BlockSpec((1, Dp), lambda i, f: (0, 0)),    # b2
            ],
            out_specs=pl.BlockSpec((tm, Dp), lambda i, f: (i, 0)),
            scratch_shapes=[
                pltpu.VMEM((tm, Dp), jnp.bfloat16),   # cached LayerNorm output
                pltpu.VMEM((tm, Dp), jnp.float32),    # residual+bias+ff2 accumulator
            ],
        ),
        # alias only when x2d is already a fresh padded temp (fast path avoids
        # the forced defensive copy that aliasing a live user buffer would add)
        input_output_aliases=({0: 0} if needs_pad else {}),
        compiler_params=pltpu.CompilerParams(
            dimension_semantics=("parallel", "arbitrary"),
            vmem_limit_bytes=vmem_limit),
    )(x2d, gamma_p, beta_p, w1_p, b1_p, w2_p, b2_p)

    if needs_pad:
        out = out[:N, :D]
    return out.reshape(B, T, D)


def reference(xs, gamma, beta, w1, b1, w2, b2):
    x = xs.astype(jnp.float32)
    mean = jnp.mean(x, axis=-1, keepdims=True)
    var = jnp.mean((x - mean) ** 2, axis=-1, keepdims=True)
    xn = (x - mean) * jax.lax.rsqrt(var + LN_EPS) * gamma + beta
    h = jnp.maximum(xn @ w1 + b1, 0.0)
    return x + (h @ w2 + b2)


if __name__ == "__main__":
    # Small shapes consistent with the module: embed_dim=32, ffn_embed_dim=64.
    B, T, D, F = 2, 8, 32, 64

    key = jax.random.PRNGKey(0)
    kx, kg, kb, kw1, kb1, kw2, kb2, kw1b, kb1b, kw2b, kxb = jax.random.split(key, 11)

    xs = jax.random.normal(kx, (B, T, D), dtype=jnp.float32)
    gamma = jnp.ones((D,), jnp.float32) + 0.01 * jax.random.normal(kg, (D,), jnp.float32)
    beta = 0.01 * jax.random.normal(kb, (D,), jnp.float32)
    w1 = jax.random.normal(kw1, (D, F), jnp.float32) / jnp.sqrt(D)
    b1 = 0.1 * jax.random.normal(kb1, (F,), jnp.float32)
    w2 = jax.random.normal(kw2, (F, D), jnp.float32) / jnp.sqrt(F)
    b2 = 0.1 * jax.random.normal(kb2, (D,), jnp.float32)
    w2_zero = jnp.zeros((F, D), jnp.float32)  # module __init__ zeroes ff2.weight

    def run_case(xs_, w1_, b1_, w2_, tol, **kw):
        out = jax.block_until_ready(
            base_sublayer(xs_, gamma, beta, w1_, b1_, w2_, b2, **kw))
        ref = reference(xs_, gamma, beta, w1_, b1_, w2_, b2)
        assert out.shape == xs_.shape and out.dtype == xs_.dtype
        err = float(jnp.max(jnp.abs(out - ref)))
        assert jnp.allclose(out, ref, atol=tol, rtol=tol), f"max abs err = {err}"

    # 1) full path, non-zero ff2 weight, device-default row tile; bf16 MXU tolerance.
    run_case(xs, w1, b1, w2, 5e-2)

    # 2) multi row-tile grid on the same data.
    run_case(xs, w1, b1, w2, 5e-2, tile_rows=8)

    # 3) ff2 weight zeroed (module init state) -> exact f32 path (acc dot term == 0).
    run_case(xs, w1, b1, w2_zero, 1e-5)

    # 4) larger FFN dim -> 2 FFN chunks on every generation, plus ragged N
    #    (N = 14 -> padded to 16) and multiple row tiles.
    F2 = 512
    xs_b = jax.random.normal(kxb, (B, 7, D), dtype=jnp.float32)
    w1_b = jax.random.normal(kw1b, (D, F2), jnp.float32) / jnp.sqrt(D)
    b1_b = 0.1 * jax.random.normal(kb1b, (F2,), jnp.float32)
    w2_b = jax.random.normal(kw2b, (F2, D), jnp.float32) / jnp.sqrt(F2)
    run_case(xs_b, w1_b, b1_b, w2_b, 5e-2, tile_rows=8, ffn_chunk=256)

    print("KERNEL_OK")
</pallas_src>

<mosaic_0001>
module attributes {stable_mosaic.version = 11 : i64} {
  func.func @_base_sublayer_kernel(%arg0: i32, %arg1: i32, %arg2: memref<16x128xf32, #tpu.memory_space<vmem>>, %arg3: memref<1x128xf32, #tpu.memory_space<vmem>>, %arg4: memref<1x128xf32, #tpu.memory_space<vmem>>, %arg5: memref<128x128xbf16, #tpu.memory_space<vmem>>, %arg6: memref<1x128xf32, #tpu.memory_space<vmem>>, %arg7: memref<128x128xbf16, #tpu.memory_space<vmem>>, %arg8: memref<1x128xf32, #tpu.memory_space<vmem>>, %arg9: memref<16x128xf32, #tpu.memory_space<vmem>>, %arg10: memref<16x128xbf16, #tpu.memory_space<vmem>>, %arg11: memref<16x128xf32, #tpu.memory_space<vmem>>) attributes {dimension_semantics = [#tpu.dimension_semantics<parallel>, #tpu.dimension_semantics<arbitrary>], iteration_bounds = array<i64: 1, 1>, scalar_prefetch = 0 : i64, scratch_operands = 2 : i64, tpu.core_type = #tpu.core_type<tc>, window_params = [{transform_indices = @transform_0, window_bounds = array<i64: 16, 128>}, {pipeline_mode = #tpu.pipeline_mode<synchronous>, transform_indices = @transform_1, window_bounds = array<i64: 1, 128>}, {pipeline_mode = #tpu.pipeline_mode<synchronous>, transform_indices = @transform_2, window_bounds = array<i64: 1, 128>}, {transform_indices = @transform_3, window_bounds = array<i64: 128, 128>}, {transform_indices = @transform_4, window_bounds = array<i64: 1, 128>}, {transform_indices = @transform_5, window_bounds = array<i64: 128, 128>}, {pipeline_mode = #tpu.pipeline_mode<synchronous>, transform_indices = @transform_6, window_bounds = array<i64: 1, 128>}, {transform_indices = @transform_7, window_bounds = array<i64: 16, 128>}]} {
    %c0_i32 = arith.constant 0 : i32
    %0 = arith.cmpi eq, %arg1, %c0_i32 : i32
    %1 = arith.extui %0 : i1 to i32
    %c0_i32_0 = arith.constant 0 : i32
    %2 = arith.cmpi ne, %1, %c0_i32_0 : i32
    scf.if %2 {
      %c0_16 = arith.constant 0 : index
      %c0_17 = arith.constant 0 : index
      %20 = vector.load %arg2[%c0_16, %c0_17] : memref<16x128xf32, #tpu.memory_space<vmem>>, vector<16x128xf32>
      %cst_18 = arith.constant dense<0.000000e+00> : vector<16xf32>
      %21 = vector.multi_reduction <add>, %20, %cst_18 [1] : vector<16x128xf32> to vector<16xf32>
      %22 = vector.shape_cast %21 : vector<16xf32> to vector<16x1xf32>
      %cst_19 = arith.constant 3.125000e-02 : f32
      %23 = vector.broadcast %cst_19 : f32 to vector<16x1xf32>
      %24 = arith.mulf %22, %23 : vector<16x1xf32>
      %25 = tpu.iota {dimensions = array<i32: 1>} : vector<16x128xi32>
      %c32_i32 = arith.constant 32 : i32
      %26 = vector.broadcast %c32_i32 : i32 to vector<16x128xi32>
      %27 = arith.cmpi slt, %25, %26 : vector<16x128xi32>
      %28 = vector.broadcast %24 : vector<16x1xf32> to vector<16x128xf32>
      %29 = arith.subf %20, %28 : vector<16x128xf32>
      %cst_20 = arith.constant 0.000000e+00 : f32
      %30 = vector.broadcast %cst_20 : f32 to vector<16x128xf32>
      %31 = arith.select %27, %29, %30 : vector<16x128xi1>, vector<16x128xf32>
      %32 = arith.mulf %31, %31 : vector<16x128xf32>
      %cst_21 = arith.constant dense<0.000000e+00> : vector<16xf32>
      %33 = vector.multi_reduction <add>, %32, %cst_21 [1] : vector<16x128xf32> to vector<16xf32>
      %34 = vector.shape_cast %33 : vector<16xf32> to vector<16x1xf32>
      %cst_22 = arith.constant 3.125000e-02 : f32
      %35 = vector.broadcast %cst_22 : f32 to vector<16x1xf32>
      %36 = arith.mulf %34, %35 : vector<16x1xf32>
      %cst_23 = arith.constant 9.99999974E-6 : f32
      %37 = vector.broadcast %cst_23 : f32 to vector<16x1xf32>
      %38 = arith.addf %36, %37 : vector<16x1xf32>
      %39 = math.rsqrt %38 : vector<16x1xf32>
      %40 = vector.broadcast %39 : vector<16x1xf32> to vector<16x128xf32>
      %41 = arith.mulf %31, %40 : vector<16x128xf32>
      %c0_24 = arith.constant 0 : index
      %c0_25 = arith.constant 0 : index
      %42 = vector.load %arg3[%c0_24, %c0_25] : memref<1x128xf32, #tpu.memory_space<vmem>>, vector<1x128xf32>
      %43 = vector.broadcast %42 : vector<1x128xf32> to vector<16x128xf32>
      %44 = arith.mulf %41, %43 : vector<16x128xf32>
      %c0_26 = arith.constant 0 : index
      %c0_27 = arith.constant 0 : index
      %45 = vector.load %arg4[%c0_26, %c0_27] : memref<1x128xf32, #tpu.memory_space<vmem>>, vector<1x128xf32>
      %46 = vector.broadcast %45 : vector<1x128xf32> to vector<16x128xf32>
      %47 = arith.addf %44, %46 : vector<16x128xf32>
      %48 = arith.truncf %47 : vector<16x128xf32> to vector<16x128xbf16>
      %c0_28 = arith.constant 0 : index
      %c0_29 = arith.constant 0 : index
      %49 = vector.load %arg10[%c0_28, %c0_29] : memref<16x128xbf16, #tpu.memory_space<vmem>>, vector<16x128xbf16>
      tpu.vector_store %arg10[%c0_28, %c0_29], %48 {strides = array<i32>} : memref<16x128xbf16, #tpu.memory_space<vmem>>, vector<16x128xbf16>,
      %c0_30 = arith.constant 0 : index
      %c0_31 = arith.constant 0 : index
      %50 = vector.load %arg8[%c0_30, %c0_31] : memref<1x128xf32, #tpu.memory_space<vmem>>, vector<1x128xf32>
      %51 = vector.broadcast %50 : vector<1x128xf32> to vector<16x128xf32>
      %52 = arith.addf %20, %51 : vector<16x128xf32>
      %c0_32 = arith.constant 0 : index
      %c0_33 = arith.constant 0 : index
      %53 = vector.load %arg11[%c0_32, %c0_33] : memref<16x128xf32, #tpu.memory_space<vmem>>, vector<16x128xf32>
      tpu.vector_store %arg11[%c0_32, %c0_33], %52 {strides = array<i32>} : memref<16x128xf32, #tpu.memory_space<vmem>>, vector<16x128xf32>,
    } else {
    }
    %c0 = arith.constant 0 : index
    %c0_1 = arith.constant 0 : index
    %3 = vector.load %arg10[%c0, %c0_1] : memref<16x128xbf16, #tpu.memory_space<vmem>>, vector<16x128xbf16>
    %c0_2 = arith.constant 0 : index
    %c0_3 = arith.constant 0 : index
    %4 = vector.load %arg5[%c0_2, %c0_3] : memref<128x128xbf16, #tpu.memory_space<vmem>>, vector<128x128xbf16>
    %cst = arith.constant dense<0.000000e+00> : vector<16x128xf32>
    %5 = tpu.matmul %3, %4, %cst {dimension_numbers = #tpu.dot_dimension_numbers<[1], [0], [0], [1], [0, 0, 1, 1], [], []>} : vector<16x128xbf16>, vector<128x128xbf16>, vector<16x128xf32> -> vector<16x128xf32>
    %c0_4 = arith.constant 0 : index
    %c0_5 = arith.constant 0 : index
    %6 = vector.load %arg6[%c0_4, %c0_5] : memref<1x128xf32, #tpu.memory_space<vmem>>, vector<1x128xf32>
    %7 = vector.broadcast %6 : vector<1x128xf32> to vector<16x128xf32>
    %8 = arith.addf %5, %7 : vector<16x128xf32>
    %cst_6 = arith.constant 0.000000e+00 : f32
    %9 = vector.broadcast %cst_6 : f32 to vector<16x128xf32>
    %10 = arith.maximumf %8, %9 : vector<16x128xf32>
    %c0_7 = arith.constant 0 : index
    %c0_8 = arith.constant 0 : index
    %11 = vector.load %arg11[%c0_7, %c0_8] : memref<16x128xf32, #tpu.memory_space<vmem>>, vector<16x128xf32>
    %12 = arith.truncf %10 : vector<16x128xf32> to vector<16x128xbf16>
    %c0_9 = arith.constant 0 : index
    %c0_10 = arith.constant 0 : index
    %13 = vector.load %arg7[%c0_9, %c0_10] : memref<128x128xbf16, #tpu.memory_space<vmem>>, vector<128x128xbf16>
    %cst_11 = arith.constant dense<0.000000e+00> : vector<16x128xf32>
    %14 = tpu.matmul %12, %13, %cst_11 {dimension_numbers = #tpu.dot_dimension_numbers<[1], [0], [0], [1], [0, 0, 1, 1], [], []>} : vector<16x128xbf16>, vector<128x128xbf16>, vector<16x128xf32> -> vector<16x128xf32>
    %15 = arith.addf %11, %14 : vector<16x128xf32>
    %c0_12 = arith.constant 0 : index
    %c0_13 = arith.constant 0 : index
    %16 = vector.load %arg11[%c0_12, %c0_13] : memref<16x128xf32, #tpu.memory_space<vmem>>, vector<16x128xf32>
    tpu.vector_store %arg11[%c0_12, %c0_13], %15 {strides = array<i32>} : memref<16x128xf32, #tpu.memory_space<vmem>>, vector<16x128xf32>,
    %c0_i32_14 = arith.constant 0 : i32
    %17 = arith.cmpi eq, %arg1, %c0_i32_14 : i32
    %18 = arith.extui %17 : i1 to i32
    %c0_i32_15 = arith.constant 0 : i32
    %19 = arith.cmpi ne, %18, %c0_i32_15 : i32
    scf.if %19 {
      %c0_16 = arith.constant 0 : index
      %c0_17 = arith.constant 0 : index
      %20 = vector.load %arg11[%c0_16, %c0_17] : memref<16x128xf32, #tpu.memory_space<vmem>>, vector<16x128xf32>
      %c0_18 = arith.constant 0 : index
      %c0_19 = arith.constant 0 : index
      %21 = vector.load %arg9[%c0_18, %c0_19] : memref<16x128xf32, #tpu.memory_space<vmem>>, vector<16x128xf32>
      tpu.vector_store %arg9[%c0_18, %c0_19], %20 {strides = array<i32>} : memref<16x128xf32, #tpu.memory_space<vmem>>, vector<16x128xf32>,
    } else {
    }
    return
  }
  func.func @transform_0(%arg0: i32, %arg1: i32) -> (i32, i32) {
    %c0_i32 = arith.constant 0 : i32
    %c0_i32_0 = arith.constant 0 : i32
    return %arg0, %c0_i32 : i32, i32
  }
  func.func @transform_1(%arg0: i32, %arg1: i32) -> (i32, i32) {
    %c0_i32 = arith.constant 0 : i32
    %c0_i32_0 = arith.constant 0 : i32
    %c0_i32_1 = arith.constant 0 : i32
    return %c0_i32, %c0_i32_0 : i32, i32
  }
  func.func @transform_2(%arg0: i32, %arg1: i32) -> (i32, i32) {
    %c0_i32 = arith.constant 0 : i32
    %c0_i32_0 = arith.constant 0 : i32
    %c0_i32_1 = arith.constant 0 : i32
    return %c0_i32, %c0_i32_0 : i32, i32
  }
  func.func @transform_3(%arg0: i32, %arg1: i32) -> (i32, i32) {
    %c0_i32 = arith.constant 0 : i32
    %c0_i32_0 = arith.constant 0 : i32
    return %c0_i32, %arg1 : i32, i32
  }
  func.func @transform_4(%arg0: i32, %arg1: i32) -> (i32, i32) {
    %c0_i32 = arith.constant 0 : i32
    %c0_i32_0 = arith.constant 0 : i32
    return %c0_i32, %arg1 : i32, i32
  }
  func.func @transform_5(%arg0: i32, %arg1: i32) -> (i32, i32) {
    %c0_i32 = arith.constant 0 : i32
    %c0_i32_0 = arith.constant 0 : i32
    return %arg1, %c0_i32 : i32, i32
  }
  func.func @transform_6(%arg0: i32, %arg1: i32) -> (i32, i32) {
    %c0_i32 = arith.constant 0 : i32
    %c0_i32_0 = arith.constant 0 : i32
    %c0_i32_1 = arith.constant 0 : i32
    return %c0_i32, %c0_i32_0 : i32, i32
  }
  func.func @transform_7(%arg0: i32, %arg1: i32) -> (i32, i32) {
    %c0_i32 = arith.constant 0 : i32
    %c0_i32_0 = arith.constant 0 : i32
    return %arg0, %c0_i32 : i32, i32
  }
}

</mosaic_0001>

<llo_original>
// kernel: tpu_custom_call.1
$region0: #{tpu_custom_call.1}
  #allocation0 [shape = 'u32[]', space=smem, size = 0x4, offset = 0x4, fixed_abs, tag = 'smem constant byte address 0x4 - core index']
  #allocation1 [shape = 'u32[72,128]{1,0:T(1,128)}', space=vmem, size = 0x9000, scoped, tag = 'internal scratch']
  #allocation2 [shape = 'bf16[16,128]{1,0:T(8,128)(2,1)}', space=vmem, size = 0x1000, scoped, tag = 'scratch operand']
  #allocation3 [shape = 'f32[16,128]{1,0:T(8,128)}', space=vmem, size = 0x2000, scoped, tag = 'scratch operand']
  %s0 = inlined_call_operand.hbm [shape: f32[16,128], index: 0, kind: input, shape index: {}, may-alias: {0,7}]
  %s1 = inlined_call_operand.vmem [shape: f32[1,128], index: 1, kind: input, shape index: {}]
  %s2 = inlined_call_operand.vmem [shape: f32[1,128], index: 2, kind: input, shape index: {}]
  %s3 = inlined_call_operand.hbm [shape: bf16[128,128], index: 3, kind: input, shape index: {}]
  %s4 = inlined_call_operand.vmem [shape: f32[1,128], index: 4, kind: input, shape index: {}]
  %s5 = inlined_call_operand.hbm [shape: bf16[128,128], index: 5, kind: input, shape index: {}]
  %s6 = inlined_call_operand.vmem [shape: f32[1,128], index: 6, kind: input, shape index: {}]
  %s7 = inlined_call_operand.hbm [shape: f32[16,128], index: 7, kind: output, shape index: {}, may-alias: {0,7}]
  %s8 = sld [smem:[#allocation0]]
  $region58: #{tpu_custom_call.1} parent=0
    _
  %s10 = ssub.s32 1, %s8
  %s11 = scalar_select 0, %s10, %s8
  $region1: #{tpu_custom_call.1} parent=0
    #allocation4 [shape = 'u8[8192]{0}', space=vmem, size = 0x2000, scoped, tag = 'input window, operand 0, single buffered']
    #allocation5 [shape = 's32[1]{0}', space=sflag, size = 0x4, scoped, tag = 'scoped memory for tpu_custom_call.1']
    #allocation6 [shape = 's32[1]{0}', space=sflag, size = 0x4, scoped, tag = 'scoped memory for tpu_custom_call.1']
    #allocation7 [shape = 'u8[32768]{0}', space=vmem, size = 0x8000, scoped, tag = 'input window, operand 3, single buffered']
    #allocation8 [shape = 's32[1]{0}', space=sflag, size = 0x4, scoped, tag = 'scoped memory for tpu_custom_call.1']
    #allocation9 [shape = 'u8[32768]{0}', space=vmem, size = 0x8000, scoped, tag = 'input window, operand 5, single buffered']
    #allocation10 [shape = 'u8[8192]{0}', space=vmem, size = 0x2000, scoped, tag = 'output window, operand 0, single buffered']
    %12 = vsyncpa [#allocation5], 0
    %13 = vsyncpa [#allocation8], 0
    %14 = vsyncpa [#allocation6], 0
    // Predicated region
    $region2: #{tpu_custom_call.1} parent=1 // pred_check
      _
    $region3: #{tpu_custom_call.1} parent=1 // pred_check_branch
      %16 = sbr.rel (0) target = $region5
    $region4: #{tpu_custom_call.1} parent=1 // pred_region
      %18 = vsyncadd [#allocation5], 0
      %s19 = sshll.u32 %s0, 4
      %s20 = int_to_ptr.hbm [resolvable:$true] %s19
      %s21 = sshll.u32 [#allocation4], 4
      %s22 = int_to_ptr.vmem [resolvable:$true] %s21
      %27 = dma.hbm_to_vmem [thread:$0]  %s20, 256, %s22, [#allocation5], 128, 128, 8
    $region5: #{tpu_custom_call.1} parent=1 // pred_fallthru
      _
    // Predicated region
    $region6: #{tpu_custom_call.1} parent=1 // pred_check
      _
    $region7: #{tpu_custom_call.1} parent=1 // pred_check_branch
      %29 = sbr.rel (0) target = $region9
    $region8: #{tpu_custom_call.1} parent=1 // pred_region
      _
    $region9: #{tpu_custom_call.1} parent=1 // pred_fallthru
      _
    // Predicated region
    $region10: #{tpu_custom_call.1} parent=1 // pred_check
      _
    $region11: #{tpu_custom_call.1} parent=1 // pred_check_branch
      %31 = sbr.rel (0) target = $region13
    $region12: #{tpu_custom_call.1} parent=1 // pred_region
      _
    $region13: #{tpu_custom_call.1} parent=1 // pred_fallthru
      _
    // Predicated region
    $region14: #{tpu_custom_call.1} parent=1 // pred_check
      _
    $region15: #{tpu_custom_call.1} parent=1 // pred_check_branch
      %33 = sbr.rel (0) target = $region17
    $region16: #{tpu_custom_call.1} parent=1 // pred_region
      %35 = vsyncadd [#allocation8], 0
      %s36 = sshll.u32 %s3, 4
      %s37 = int_to_ptr.hbm [resolvable:$true] %s36
      %s38 = sshll.u32 [#allocation7], 4
      %s39 = int_to_ptr.vmem [resolvable:$true] %s38
      %44 = dma.hbm_to_vmem [thread:$0]  %s37, 1024, %s39, [#allocation8], 64, 64, 4
    $region17: #{tpu_custom_call.1} parent=1 // pred_fallthru
      _
    // Predicated region
    $region18: #{tpu_custom_call.1} parent=1 // pred_check
      _
    $region19: #{tpu_custom_call.1} parent=1 // pred_check_branch
      %46 = sbr.rel (0) target = $region21
    $region20: #{tpu_custom_call.1} parent=1 // pred_region
      _
    $region21: #{tpu_custom_call.1} parent=1 // pred_fallthru
      _
    // Predicated region
    $region22: #{tpu_custom_call.1} parent=1 // pred_check
      _
    $region23: #{tpu_custom_call.1} parent=1 // pred_check_branch
      %48 = sbr.rel (0) target = $region25
    $region24: #{tpu_custom_call.1} parent=1 // pred_region
      %50 = vsyncadd [#allocation8], 0
      %s51 = sshll.u32 %s5, 4
      %s52 = int_to_ptr.hbm [resolvable:$true] %s51
      %s53 = sshll.u32 [#allocation9], 4
      %s54 = int_to_ptr.vmem [resolvable:$true] %s53
      %59 = dma.hbm_to_vmem [thread:$0]  %s52, 1024, %s54, [#allocation8], 64, 64, 4
    $region25: #{tpu_custom_call.1} parent=1 // pred_fallthru
      _
    // Predicated region
    $region26: #{tpu_custom_call.1} parent=1 // pred_check
      _
    $region27: #{tpu_custom_call.1} parent=1 // pred_check_branch
      %61 = sbr.rel (0) target = $region29
    $region28: #{tpu_custom_call.1} parent=1 // pred_region
      _
    $region29: #{tpu_custom_call.1} parent=1 // pred_fallthru
      _
    // Predicated region
    $region30: #{tpu_custom_call.1} parent=1 // pred_check
      _
    $region31: #{tpu_custom_call.1} parent=1 // pred_check_branch
      %63 = sbr.rel (0) target = $region33
    $region32: #{tpu_custom_call.1} parent=1 // pred_region
      %65 = dma.done [#allocation5], 256
    $region33: #{tpu_custom_call.1} parent=1 // pred_fallthru
      _
    // Predicated region
    $region34: #{tpu_custom_call.1} parent=1 // pred_check
      _
    $region35: #{tpu_custom_call.1} parent=1 // pred_check_branch
      %67 = sbr.rel (0) target = $region37
    $region36: #{tpu_custom_call.1} parent=1 // pred_region
      %69 = dma.done [#allocation8], 1024
    $region37: #{tpu_custom_call.1} parent=1 // pred_fallthru
      _
    // Predicated region
    $region38: #{tpu_custom_call.1} parent=1 // pred_check
      _
    $region39: #{tpu_custom_call.1} parent=1 // pred_check_branch
      %71 = sbr.rel (0) target = $region41
    $region40: #{tpu_custom_call.1} parent=1 // pred_region
      %73 = dma.done [#allocation8], 1024
    $region41: #{tpu_custom_call.1} parent=1 // pred_fallthru
      _
    %p74 = scmp.eq.s32.totalorder 0, 0
    // Predicated region
    $region42: #{tpu_custom_call.1} parent=1 // pred_check
      %p75 = pneg %p74
    $region43: #{tpu_custom_call.1} parent=1 // pred_check_branch
      %77 = sbr.rel (%p75) target = $region45
    $region44: #{tpu_custom_call.1} parent=1 // pred_region
      %v78 = vld [vmem:[#allocation4] sm:$0xff]
      %v79 = vld [vmem:[#allocation4 + $0x8] sm:$0xff]
      %80 = vadd.xlane.f32.xlu0 %v78
      %v81 = vpop.xlane.xlu0 %80
      %82 = vadd.xlane.f32.xlu0 %v79
      %v83 = vpop.xlane.xlu0 %82
      %v84 = vmul.f32 %v81, 0.03125
      %v85 = vmul.f32 %v83, 0.03125
      %v86 = vlaneseq
      %v87 = vand.u32 %v86, 127
      %vm88 = vcmp.lt.s32.totalorder %v87, 32
      %v89 = vsub.f32 %v78, %v84
      %v90 = vsub.f32 %v79, %v85
      %v91 = vsel %vm88, %v89, 0.0
      %v92 = vsel %vm88, %v90, 0.0
      %v93 = vmul.f32 %v91, %v91
      %v94 = vmul.f32 %v92, %v92
      %95 = vadd.xlane.f32.xlu0 %v93
      %v96 = vpop.xlane.xlu0 %95
      %97 = vadd.xlane.f32.xlu0 %v94
      %v98 = vpop.xlane.xlu0 %97
      %v99 = vmul.f32 %v96, 0.03125
      %v100 = vmul.f32 %v98, 0.03125
      %v101 = vadd.f32 %v99, 1e-05
      %v102 = vadd.f32 %v100, 1e-05
      %v103 = vrsqrt.pop %v101
      %v104 = vmul.f32 %v103, %v101
      %v105 = vmul.f32 %v104, %v103
      %v106 = vmul.f32 0.5, %v105
      %v107 = vsub.f32 1.5, %v106
      %v108 = vmul.f32 %v103, %v107
      %vm109 = vweird.f32 %v101
      %vm110 = vweird.f32 %v103
      %vm111 = vmor %vm109, %vm110
      %v112 = vsel %vm111, %v103, %v108
      %v113 = vrsqrt.pop %v102
      %v114 = vmul.f32 %v113, %v102
      %v115 = vmul.f32 %v114, %v113
      %v116 = vmul.f32 0.5, %v115
      %v117 = vsub.f32 1.5, %v116
      %v118 = vmul.f32 %v113, %v117
      %vm119 = vweird.f32 %v102
      %vm120 = vweird.f32 %v113
      %vm121 = vmor %vm119, %vm120
      %v122 = vsel %vm121, %v113, %v118
      %v123 = vmul.f32 %v91, %v112
      %v124 = vmul.f32 %v92, %v122
      %v125 = vld [vmem:[%s1] sm:$0x1]
      %v127 = vperm.slane %v125, 0
      %v129 = vmul.f32 %v123, %v127
      %v130 = vmul.f32 %v124, %v127
      %v131 = vld [vmem:[%s2] sm:$0x1]
      %v133 = vperm.slane %v131, 0
      %v135 = vadd.f32 %v129, %v133
      %v136 = vadd.f32 %v130, %v133
      %v137 = vpack.c.bf16 %v135, %v135
      %v138 = vpack.c.bf16 %v136, %v136
      %139 = vst [vmem:[#allocation2] sm:$0xf] %v137
      %140 = vst [vmem:[#allocation2 + $0x4] sm:$0xf] %v138
      %v141 = vld [vmem:[%s6] sm:$0x1]
      %v143 = vperm.slane %v141, 0
      %v145 = vadd.f32 %v78, %v143
      %v146 = vadd.f32 %v79, %v143
      %147 = vst [vmem:[#allocation3] sm:$0xff] %v145
      %148 = vst [vmem:[#allocation3 + $0x8] sm:$0xff] %v146
    $region45: #{tpu_custom_call.1} parent=1 // pred_fallthru
      _
    %v149 = vld [vmem:[#allocation2] sm:$0xf]
    %v150 = vld [vmem:[#allocation2 + $0x4] sm:$0xf]
    %v151 = vld [vmem:[#allocation7] sm:$0xf]
    %v152 = vld [vmem:[#allocation7 + $0x4] sm:$0xf]
    %v153 = vld [vmem:[#allocation7 + $0x8] sm:$0xf]
    %v154 = vld [vmem:[#allocation7 + $0xc] sm:$0xf]
    %v155 = vld [vmem:[#allocation7 + $0x10] sm:$0xf]
    %v156 = vld [vmem:[#allocation7 + $0x14] sm:$0xf]
    %v157 = vld [vmem:[#allocation7 + $0x18] sm:$0xf]
    %v158 = vld [vmem:[#allocation7 + $0x1c] sm:$0xf]
    %v159 = vld [vmem:[#allocation7 + $0x20] sm:$0xf]
    %v160 = vld [vmem:[#allocation7 + $0x24] sm:$0xf]
    %v161 = vld [vmem:[#allocation7 + $0x28] sm:$0xf]
    %v162 = vld [vmem:[#allocation7 + $0x2c] sm:$0xf]
    %v163 = vld [vmem:[#allocation7 + $0x30] sm:$0xf]
    %v164 = vld [vmem:[#allocation7 + $0x34] sm:$0xf]
    %v165 = vld [vmem:[#allocation7 + $0x38] sm:$0xf]
    %v166 = vld [vmem:[#allocation7 + $0x3c] sm:$0xf]
    %v167 = vld [vmem:[%s4] sm:$0x1]
    %v169 = vperm.slane %v167, 0
    %v173 = vunpack.c.l.b16 %v149
    %v174 = vunpack.c.l.b16 %v150
    %v175 = vpack.c.b16 %v174, %v173
    %v193 = vunpack.c.l.b16 %v151
    %v194 = vunpack.c.l.b16 %v152
    %v195 = vunpack.c.l.b16 %v153
    %v196 = vunpack.c.l.b16 %v154
    %v197 = vunpack.c.l.b16 %v155
    %v198 = vunpack.c.l.b16 %v156
    %v199 = vunpack.c.l.b16 %v157
    %v200 = vunpack.c.l.b16 %v158
    %v201 = vunpack.c.l.b16 %v159
    %v202 = vunpack.c.l.b16 %v160
    %v203 = vunpack.c.l.b16 %v161
    %v204 = vunpack.c.l.b16 %v162
    %v205 = vunpack.c.l.b16 %v163
    %v206 = vunpack.c.l.b16 %v164
    %v207 = vunpack.c.l.b16 %v165
    %v208 = vunpack.c.l.b16 %v166
    %v209 = vpack.c.b16 %v194, %v193
    %v210 = vpack.c.b16 %v196, %v195
    %v211 = vpack.c.b16 %v198, %v197
    %v212 = vpack.c.b16 %v200, %v199
    %v213 = vpack.c.b16 %v202, %v201
    %v214 = vpack.c.b16 %v204, %v203
    %v215 = vpack.c.b16 %v206, %v205
    %v216 = vpack.c.b16 %v208, %v207
    %225 = vmatpush.bf16.msra.mxu0 %v216
    %226 = vmatpush.bf16.msra.mxu0 %v215
    %227 = vmatpush.bf16.msra.mxu0 %v214
    %228 = vmatpush.bf16.msra.mxu0 %v213
    %229 = vmatpush.bf16.msra.mxu0 %v212
    %230 = vmatpush.bf16.msra.mxu0 %v211
    %231 = vmatpush.bf16.msra.mxu0 %v210
    %232 = vmatpush.bf16.msra.mxu0 %v209
    %233 = vmatmul.bf16.gmra.mxu0 %v175
    %v234 = vpop.f32.mrf.mxu0
    %v235 = vadd.f32 %v169, %v234
    %v236 = vpop.f32.mrf.mxu0
    %v237 = vadd.f32 %v169, %v236
    %238 = vdwg.mxu0
    %v239 = vmax.f32 %v235, 0.0
    %v240 = vmax.f32 %v237, 0.0
    %v241 = vld [vmem:[#allocation3] sm:$0xff]
    %v242 = vld [vmem:[#allocation3 + $0x8] sm:$0xff]
    %v243 = vpack.c.bf16 %v240, %v239
    %v244 = vld [vmem:[#allocation9] sm:$0xf]
    %v245 = vld [vmem:[#allocation9 + $0x4] sm:$0xf]
    %v246 = vld [vmem:[#allocation9 + $0x8] sm:$0xf]
    %v247 = vld [vmem:[#allocation9 + $0xc] sm:$0xf]
    %v248 = vld [vmem:[#allocation9 + $0x10] sm:$0xf]
    %v249 = vld [vmem:[#allocation9 + $0x14] sm:$0xf]
    %v250 = vld [vmem:[#allocation9 + $0x18] sm:$0xf]
    %v251 = vld [vmem:[#allocation9 + $0x1c] sm:$0xf]
    %v252 = vld [vmem:[#allocation9 + $0x20] sm:$0xf]
    %v253 = vld [vmem:[#allocation9 + $0x24] sm:$0xf]
    %v254 = vld [vmem:[#allocation9 + $0x28] sm:$0xf]
    %v255 = vld [vmem:[#allocation9 + $0x2c] sm:$0xf]
    %v256 = vld [vmem:[#allocation9 + $0x30] sm:$0xf]
    %v257 = vld [vmem:[#allocation9 + $0x34] sm:$0xf]
    %v258 = vld [vmem:[#allocation9 + $0x38] sm:$0xf]
    %v259 = vld [vmem:[#allocation9 + $0x3c] sm:$0xf]
    %v276 = vunpack.c.l.b16 %v244
    %v277 = vunpack.c.l.b16 %v245
    %v278 = vunpack.c.l.b16 %v246
    %v279 = vunpack.c.l.b16 %v247
    %v280 = vunpack.c.l.b16 %v248
    %v281 = vunpack.c.l.b16 %v249
    %v282 = vunpack.c.l.b16 %v250
    %v283 = vunpack.c.l.b16 %v251
    %v284 = vunpack.c.l.b16 %v252
    %v285 = vunpack.c.l.b16 %v253
    %v286 = vunpack.c.l.b16 %v254
    %v287 = vunpack.c.l.b16 %v255
    %v288 = vunpack.c.l.b16 %v256
    %v289 = vunpack.c.l.b16 %v257
    %v290 = vunpack.c.l.b16 %v258
    %v291 = vunpack.c.l.b16 %v259
    %v292 = vpack.c.b16 %v277, %v276
    %v293 = vpack.c.b16 %v279, %v278
    %v294 = vpack.c.b16 %v281, %v280
    %v295 = vpack.c.b16 %v283, %v282
    %v296 = vpack.c.b16 %v285, %v284
    %v297 = vpack.c.b16 %v287, %v286
    %v298 = vpack.c.b16 %v289, %v288
    %v299 = vpack.c.b16 %v291, %v290
    %308 = vmatpush.bf16.msra.mxu0 %v299
    %309 = vmatpush.bf16.msra.mxu0 %v298
    %310 = vmatpush.bf16.msra.mxu0 %v297
    %311 = vmatpush.bf16.msra.mxu0 %v296
    %312 = vmatpush.bf16.msra.mxu0 %v295
    %313 = vmatpush.bf16.msra.mxu0 %v294
    %314 = vmatpush.bf16.msra.mxu0 %v293
    %315 = vmatpush.bf16.msra.mxu0 %v292
    %316 = vmatmul.bf16.gmra.mxu0 %v243
    %v317 = vpop.f32.mrf.mxu0
    %v318 = vadd.f32 0.0, %v317
    %v319 = vpop.f32.mrf.mxu0
    %v320 = vadd.f32 0.0, %v319
    %321 = vdwg.mxu0
    %v322 = vadd.f32 %v241, %v318
    %v323 = vadd.f32 %v242, %v320
    %324 = vst [vmem:[#allocation3] sm:$0xff] %v322
    %325 = vst [vmem:[#allocation3 + $0x8] sm:$0xff] %v323
    // Predicated region
    $region46: #{tpu_custom_call.1} parent=1 // pred_check
      %p326 = pneg %p74
    $region47: #{tpu_custom_call.1} parent=1 // pred_check_branch
      %328 = sbr.rel (%p326) target = $region49
    $region48: #{tpu_custom_call.1} parent=1 // pred_region
      %v329 = vld [vmem:[#allocation3] sm:$0xff]
      %v330 = vld [vmem:[#allocation3 + $0x8] sm:$0xff]
      %331 = vst [vmem:[#allocation10] sm:$0xff] %v329
      %332 = vst [vmem:[#allocation10 + $0x8] sm:$0xff] %v330
    $region49: #{tpu_custom_call.1} parent=1 // pred_fallthru
      _
    // Predicated region
    $region50: #{tpu_custom_call.1} parent=1 // pred_check
      _
    $region51: #{tpu_custom_call.1} parent=1 // pred_check_branch
      %334 = sbr.rel (0) target = $region53
    $region52: #{tpu_custom_call.1} parent=1 // pred_region
      %336 = vsyncadd [#allocation6], 0
      %s337 = sshll.u32 [#allocation10], 4
      %s338 = int_to_ptr.vmem [resolvable:$true] %s337
      %s339 = sshll.u32 %s7, 4
      %s340 = int_to_ptr.hbm [resolvable:$true] %s339
      %345 = dma.vmem_to_hbm [thread:$0]  %s338, 256, %s340, [#allocation6], 128, 128, 8
    $region53: #{tpu_custom_call.1} parent=1 // pred_fallthru
      _
    // Predicated region
    $region54: #{tpu_custom_call.1} parent=1 // pred_check
      _
    $region55: #{tpu_custom_call.1} parent=1 // pred_check_branch
      %347 = sbr.rel (0) target = $region57
    $region56: #{tpu_custom_call.1} parent=1 // pred_region
      %349 = dma.done [#allocation6], 256
    $region57: #{tpu_custom_call.1} parent=1 // pred_fallthru
      _
    %350 = vsyncpa [#allocation5], 1
    %351 = vsyncpa [#allocation8], 1
    %352 = vsyncpa [#allocation6], 1

</llo_original>
